<compile_context>
chip_gen: v6e
topology: v6e:2x2x1
jax: 0.10.0
libtpu: 0.0.40
codegen_flags: <defaults>
</compile_context>

<pallas_src>
import jax
import jax.numpy as jnp
import numpy as np
from jax import lax
from jax.experimental import pallas as pl
from jax.experimental.pallas import tpu as pltpu


def _fd_kernel(x_ref, wc_ref, bc_ref, w1_ref, b1_ref, w2_ref, b2_ref,
               f1_ref, f2_ref, m_ref):
    # x_ref : (L, bb, C)   channels-last block, bb batch elements on the sublane axis
    # wc_ref: (5, C, H)    combined conv-tap weights (see wrapper):
    #                      [W0+W1+W2+W3+W4, -(W3+W4), -W4, -W0, -(W0+W1)]
    # bc_ref: (1, H)   w1_ref: (H, 2H)   b1_ref: (1, 2H)   w2_ref: (2H, H)   b2_ref: (1, H)
    # f1/f2 : (L, bb, C)   m_ref: (bb, H)
    f32 = jnp.float32
    L = x_ref.shape[0]
    x = x_ref[...]                                       # single load, native dtype

    # Conv1d + AdaptiveAvgPool1d(1) collapsed by linearity:
    #   L * (pooled - b) = T@(W0+..+W4) - x[0]@(W3+W4) - x[1]@W4 - x[L-2]@W0 - x[L-1]@(W0+W1)
    # where T is the column sum of x over L.  No (L, H) conv output is ever built.
    rows = (jnp.sum(x.astype(f32), axis=0),              # T        (bb, C)
            x[0].astype(f32),                            # x[0]
            x[1].astype(f32),                            # x[1]
            x[L - 2].astype(f32),                        # x[L-2]
            x[L - 1].astype(f32))                        # x[L-1]
    acc = jnp.dot(rows[0], wc_ref[0].astype(f32), preferred_element_type=f32)
    for k in range(1, 5):                                # static, unrolled
        acc = acc + jnp.dot(rows[k], wc_ref[k].astype(f32),
                            preferred_element_type=f32)
    pooled = bc_ref[...].astype(f32) + acc * (1.0 / L)   # (bb, H)

    # fc_1 -> ReLU -> fc_2 -> Sigmoid, batched over the bb sublane rows.
    h = jnp.dot(pooled, w1_ref[...].astype(f32), preferred_element_type=f32)
    h = jnp.maximum(h + b1_ref[...].astype(f32), 0.0)    # (bb, 2H)
    m = jnp.dot(h, w2_ref[...].astype(f32), preferred_element_type=f32)
    m = jax.nn.sigmoid(m + b2_ref[...].astype(f32))      # (bb, H), f32
    m_ref[...] = m.astype(m_ref.dtype)

    # feature_one = mask * x ; feature_two = x - feature_one  (== (1 - mask) * x)
    m_x = m.astype(x.dtype)[None, :, :]                  # (1, bb, C); requires H == C
    f1 = x * m_x                                         # broadcast over L, native dtype
    f1_ref[...] = f1.astype(f1_ref.dtype)
    f2_ref[...] = (x - f1).astype(f2_ref.dtype)


def _pick_block_batch(B, C, L, itemsize):
    """Batch elements per grid step: (8,128)-legal, byte-budgeted, grid >= 2 if possible."""
    # Legal bb for a (L, bb, C) block: bb % 8 == 0, or bb == B (block spans the full dim).
    cands = [bb for bb in range(8, B, 8) if B % bb == 0]
    if not cands:
        return B                                         # small B: one step over the full batch
    step_bytes = lambda bb: 3 * L * bb * C * itemsize    # x + f1 + f2 per step (pre double-buffer)
    best = cands[0]                                      # smallest legal tile as fallback
    for bb in cands:                                     # ascending: keep the largest that fits
        if step_bytes(bb) <= (1 << 20):                  # ~1 MiB/step -> ~85% of HBM roofline
            best = bb
    return best                                          # bb < B here, so grid = B//bb >= 2


def feature_disentangle(x_ncl, params, *, block_batch=None):
    """x_ncl: (B, input_size, L), exactly like the PyTorch module's input."""
    w_conv, b_conv, w1, b1, w2, b2 = params
    B, C, L = x_ncl.shape
    H = b_conv.shape[0]
    H2 = b1.shape[0]
    # The einsum in the PyTorch forward broadcasts the (B, H) mask over the (B, L, C)
    # features, so hidden_size must equal input_size.
    assert H == C, "FeatureDisentangle forward requires hidden_size == input_size"
    assert L >= 2, "need at least 2 time steps for the k=5 conv edge algebra"

    bb = block_batch if block_batch is not None else _pick_block_batch(
        B, C, L, x_ncl.dtype.itemsize)
    assert B % bb == 0 and (bb == B or bb % 8 == 0)
    out_dtype = x_ncl.dtype

    # Single relayout to the output-native (L, B, C) layout (one HBM pass).  No padding
    # is materialised: the pooled-conv algebra only needs column sums + 4 edge rows.
    # TODO(synk): fuse this transpose into the kernel (read (bb, C, L) blocks and
    # transpose via XLU in VMEM) to drop this remaining extra HBM pass entirely.
    x_lbc = jnp.transpose(x_ncl, (2, 0, 1))              # (L, B, C)

    # Combined conv-tap weights (tiny, computed once in the wrapper):
    #   pooled = b + (1/L) * [ T@(W0+..+W4) - x0@(W3+W4) - x1@W4 - x[L-2]@W0 - x[L-1]@(W0+W1) ]
    W = jnp.transpose(w_conv, (2, 1, 0))                 # (5, C, H): W[k][c,h] = w_conv[h,c,k]
    wcomb = jnp.stack([W[0] + W[1] + W[2] + W[3] + W[4],
                       -(W[3] + W[4]),
                       -W[4],
                       -W[0],
                       -(W[0] + W[1])], axis=0)          # (5, C, H)
    bc2 = b_conv.reshape(1, H)
    b12 = b1.reshape(1, H2)
    b22 = b2.reshape(1, H)

    f1, f2, mask = pl.pallas_call(
        _fd_kernel,
        out_shape=(
            jax.ShapeDtypeStruct((L, B, C), out_dtype),   # feature_one
            jax.ShapeDtypeStruct((L, B, C), out_dtype),   # feature_two
            jax.ShapeDtypeStruct((B, H), out_dtype),      # mask
        ),
        grid_spec=pltpu.PrefetchScalarGridSpec(
            num_scalar_prefetch=0,
            grid=(B // bb,),
            in_specs=[
                pl.BlockSpec((L, bb, C), lambda g: (0, g, 0)),   # x (channels-last)
                pl.BlockSpec((5, C, H), lambda g: (0, 0, 0)),    # combined conv weights
                pl.BlockSpec((1, H), lambda g: (0, 0)),          # conv bias
                pl.BlockSpec((H, H2), lambda g: (0, 0)),         # fc_1 W
                pl.BlockSpec((1, H2), lambda g: (0, 0)),         # fc_1 b
                pl.BlockSpec((H2, H), lambda g: (0, 0)),         # fc_2 W
                pl.BlockSpec((1, H), lambda g: (0, 0)),          # fc_2 b
            ],
            out_specs=[
                pl.BlockSpec((L, bb, C), lambda g: (0, g, 0)),   # feature_one
                pl.BlockSpec((L, bb, C), lambda g: (0, g, 0)),   # feature_two
                pl.BlockSpec((bb, H), lambda g: (g, 0)),         # mask
            ],
        ),
        compiler_params=pltpu.CompilerParams(
            dimension_semantics=("parallel",),
            vmem_limit_bytes=32 * 1024 * 1024,            # explicit, safe on v5e/v6e/v7x
        ),
    )(x_lbc, wcomb, bc2, w1, b12, w2, b22)

    return f1, f2, mask


def reference_forward(x_ncl, params):
    """Pure-JAX reference matching the PyTorch forward."""
    w_conv, b_conv, w1, b1, w2, b2 = params
    conv = lax.conv_general_dilated(
        x_ncl, w_conv, window_strides=(1,), padding=[(2, 2)],
        dimension_numbers=("NCH", "OIH", "NCH")) + b_conv[None, :, None]
    pooled = conv.mean(-1)                                # (B, H)
    h = jnp.maximum(pooled @ w1 + b1, 0.0)
    m = jax.nn.sigmoid(h @ w2 + b2)                       # (B, H)
    xt = jnp.transpose(x_ncl, (0, 2, 1))                  # (B, L, C)
    f1 = m[:, None, :] * xt
    f2 = (1.0 - m)[:, None, :] * xt
    return jnp.transpose(f1, (1, 0, 2)), jnp.transpose(f2, (1, 0, 2)), m


if __name__ == "__main__":
    B, L = 2, 16
    input_size = hidden_size = 32          # einsum in forward requires these equal
    C, H, H2 = input_size, hidden_size, 2 * hidden_size

    key = jax.random.PRNGKey(0)
    ks = jax.random.split(key, 7)
    # Deterministic synthetic parameters (PyTorch shapes: conv (H, C, 5); linears used as x @ W).
    w_conv = 0.1 * jax.random.normal(ks[0], (H, C, 5), jnp.float32)
    b_conv = 0.1 * jax.random.normal(ks[1], (H,), jnp.float32)
    w1 = 0.1 * jax.random.normal(ks[2], (H, H2), jnp.float32)
    b1 = 0.1 * jax.random.normal(ks[3], (H2,), jnp.float32)
    w2 = 0.1 * jax.random.normal(ks[4], (H2, H), jnp.float32)
    b2 = 0.1 * jax.random.normal(ks[5], (H,), jnp.float32)
    params = (w_conv, b_conv, w1, b1, w2, b2)

    x = jax.random.normal(ks[6], (B, C, L), jnp.float32)   # NCL, like PyTorch

    f1, f2, mask = feature_disentangle(x, params)
    jax.block_until_ready((f1, f2, mask))

    rf1, rf2, rmask = reference_forward(x, params)
    np.testing.assert_allclose(np.asarray(f1), np.asarray(rf1), rtol=1e-5, atol=1e-5)
    np.testing.assert_allclose(np.asarray(f2), np.asarray(rf2), rtol=1e-5, atol=1e-5)
    np.testing.assert_allclose(np.asarray(mask), np.asarray(rmask), rtol=1e-5, atol=1e-5)

    assert f1.shape == (L, B, C) and f2.shape == (L, B, C) and mask.shape == (B, H)
    print("KERNEL_OK")
</pallas_src>

<mosaic_0001>
module attributes {stable_mosaic.version = 11 : i64} {
  func.func @_fd_kernel(%arg0: i32, %arg1: memref<16x2x32xf32, #tpu.memory_space<vmem>>, %arg2: memref<5x32x32xf32, #tpu.memory_space<vmem>>, %arg3: memref<1x32xf32, #tpu.memory_space<vmem>>, %arg4: memref<32x64xf32, #tpu.memory_space<vmem>>, %arg5: memref<1x64xf32, #tpu.memory_space<vmem>>, %arg6: memref<64x32xf32, #tpu.memory_space<vmem>>, %arg7: memref<1x32xf32, #tpu.memory_space<vmem>>, %arg8: memref<16x2x32xf32, #tpu.memory_space<vmem>>, %arg9: memref<16x2x32xf32, #tpu.memory_space<vmem>>, %arg10: memref<2x32xf32, #tpu.memory_space<vmem>>) attributes {dimension_semantics = [#tpu.dimension_semantics<parallel>], iteration_bounds = array<i64: 1>, scalar_prefetch = 0 : i64, scratch_operands = 0 : i64, tpu.core_type = #tpu.core_type<tc>, window_params = [{transform_indices = @transform_0, window_bounds = array<i64: 16, 2, 32>}, {pipeline_mode = #tpu.pipeline_mode<synchronous>, transform_indices = @transform_1, window_bounds = array<i64: 5, 32, 32>}, {pipeline_mode = #tpu.pipeline_mode<synchronous>, transform_indices = @transform_2, window_bounds = array<i64: 1, 32>}, {pipeline_mode = #tpu.pipeline_mode<synchronous>, transform_indices = @transform_3, window_bounds = array<i64: 32, 64>}, {pipeline_mode = #tpu.pipeline_mode<synchronous>, transform_indices = @transform_4, window_bounds = array<i64: 1, 64>}, {pipeline_mode = #tpu.pipeline_mode<synchronous>, transform_indices = @transform_5, window_bounds = array<i64: 64, 32>}, {pipeline_mode = #tpu.pipeline_mode<synchronous>, transform_indices = @transform_6, window_bounds = array<i64: 1, 32>}, {transform_indices = @transform_7, window_bounds = array<i64: 16, 2, 32>}, {transform_indices = @transform_8, window_bounds = array<i64: 16, 2, 32>}, {transform_indices = @transform_9, window_bounds = array<i64: 2, 32>}]} {
    %c0 = arith.constant 0 : index
    %c0_0 = arith.constant 0 : index
    %c0_1 = arith.constant 0 : index
    %0 = vector.load %arg1[%c0, %c0_0, %c0_1] : memref<16x2x32xf32, #tpu.memory_space<vmem>>, vector<16x2x32xf32>
    %cst = arith.constant dense<0.000000e+00> : vector<2x32xf32>
    %1 = vector.multi_reduction <add>, %0, %cst [0] : vector<16x2x32xf32> to vector<2x32xf32>
    %2 = vector.extract_strided_slice %0 {offsets = [0, 0, 0], sizes = [1, 2, 32], strides = [1, 1, 1]} : vector<16x2x32xf32> to vector<1x2x32xf32>
    %3 = vector.shape_cast %2 : vector<1x2x32xf32> to vector<2x32xf32>
    %4 = vector.extract_strided_slice %0 {offsets = [1, 0, 0], sizes = [1, 2, 32], strides = [1, 1, 1]} : vector<16x2x32xf32> to vector<1x2x32xf32>
    %5 = vector.shape_cast %4 : vector<1x2x32xf32> to vector<2x32xf32>
    %6 = vector.extract_strided_slice %0 {offsets = [14, 0, 0], sizes = [1, 2, 32], strides = [1, 1, 1]} : vector<16x2x32xf32> to vector<1x2x32xf32>
    %7 = vector.shape_cast %6 : vector<1x2x32xf32> to vector<2x32xf32>
    %8 = vector.extract_strided_slice %0 {offsets = [15, 0, 0], sizes = [1, 2, 32], strides = [1, 1, 1]} : vector<16x2x32xf32> to vector<1x2x32xf32>
    %9 = vector.shape_cast %8 : vector<1x2x32xf32> to vector<2x32xf32>
    %c0_2 = arith.constant 0 : index
    %c0_3 = arith.constant 0 : index
    %c0_4 = arith.constant 0 : index
    %10 = vector.load %arg2[%c0_2, %c0_3, %c0_4] : memref<5x32x32xf32, #tpu.memory_space<vmem>>, vector<1x32x32xf32>
    %11 = vector.shape_cast %10 : vector<1x32x32xf32> to vector<32x32xf32>
    %cst_5 = arith.constant dense<0.000000e+00> : vector<2x32xf32>
    %12 = tpu.matmul %1, %11, %cst_5 {dimension_numbers = #tpu.dot_dimension_numbers<[1], [0], [0], [1], [0, 0, 1, 1], [], []>} : vector<2x32xf32>, vector<32x32xf32>, vector<2x32xf32> -> vector<2x32xf32>
    %c1 = arith.constant 1 : index
    %c0_6 = arith.constant 0 : index
    %c0_7 = arith.constant 0 : index
    %13 = vector.load %arg2[%c1, %c0_6, %c0_7] : memref<5x32x32xf32, #tpu.memory_space<vmem>>, vector<1x32x32xf32>
    %14 = vector.shape_cast %13 : vector<1x32x32xf32> to vector<32x32xf32>
    %cst_8 = arith.constant dense<0.000000e+00> : vector<2x32xf32>
    %15 = tpu.matmul %3, %14, %cst_8 {dimension_numbers = #tpu.dot_dimension_numbers<[1], [0], [0], [1], [0, 0, 1, 1], [], []>} : vector<2x32xf32>, vector<32x32xf32>, vector<2x32xf32> -> vector<2x32xf32>
    %16 = arith.addf %12, %15 : vector<2x32xf32>
    %c2 = arith.constant 2 : index
    %c0_9 = arith.constant 0 : index
    %c0_10 = arith.constant 0 : index
    %17 = vector.load %arg2[%c2, %c0_9, %c0_10] : memref<5x32x32xf32, #tpu.memory_space<vmem>>, vector<1x32x32xf32>
    %18 = vector.shape_cast %17 : vector<1x32x32xf32> to vector<32x32xf32>
    %cst_11 = arith.constant dense<0.000000e+00> : vector<2x32xf32>
    %19 = tpu.matmul %5, %18, %cst_11 {dimension_numbers = #tpu.dot_dimension_numbers<[1], [0], [0], [1], [0, 0, 1, 1], [], []>} : vector<2x32xf32>, vector<32x32xf32>, vector<2x32xf32> -> vector<2x32xf32>
    %20 = arith.addf %16, %19 : vector<2x32xf32>
    %c3 = arith.constant 3 : index
    %c0_12 = arith.constant 0 : index
    %c0_13 = arith.constant 0 : index
    %21 = vector.load %arg2[%c3, %c0_12, %c0_13] : memref<5x32x32xf32, #tpu.memory_space<vmem>>, vector<1x32x32xf32>
    %22 = vector.shape_cast %21 : vector<1x32x32xf32> to vector<32x32xf32>
    %cst_14 = arith.constant dense<0.000000e+00> : vector<2x32xf32>
    %23 = tpu.matmul %7, %22, %cst_14 {dimension_numbers = #tpu.dot_dimension_numbers<[1], [0], [0], [1], [0, 0, 1, 1], [], []>} : vector<2x32xf32>, vector<32x32xf32>, vector<2x32xf32> -> vector<2x32xf32>
    %24 = arith.addf %20, %23 : vector<2x32xf32>
    %c4 = arith.constant 4 : index
    %c0_15 = arith.constant 0 : index
    %c0_16 = arith.constant 0 : index
    %25 = vector.load %arg2[%c4, %c0_15, %c0_16] : memref<5x32x32xf32, #tpu.memory_space<vmem>>, vector<1x32x32xf32>
    %26 = vector.shape_cast %25 : vector<1x32x32xf32> to vector<32x32xf32>
    %cst_17 = arith.constant dense<0.000000e+00> : vector<2x32xf32>
    %27 = tpu.matmul %9, %26, %cst_17 {dimension_numbers = #tpu.dot_dimension_numbers<[1], [0], [0], [1], [0, 0, 1, 1], [], []>} : vector<2x32xf32>, vector<32x32xf32>, vector<2x32xf32> -> vector<2x32xf32>
    %28 = arith.addf %24, %27 : vector<2x32xf32>
    %c0_18 = arith.constant 0 : index
    %c0_19 = arith.constant 0 : index
    %29 = vector.load %arg3[%c0_18, %c0_19] : memref<1x32xf32, #tpu.memory_space<vmem>>, vector<1x32xf32>
    %cst_20 = arith.constant 6.250000e-02 : f32
    %30 = vector.broadcast %cst_20 : f32 to vector<2x32xf32>
    %31 = arith.mulf %28, %30 : vector<2x32xf32>
    %32 = vector.broadcast %29 : vector<1x32xf32> to vector<2x32xf32>
    %33 = arith.addf %32, %31 : vector<2x32xf32>
    %c0_21 = arith.constant 0 : index
    %c0_22 = arith.constant 0 : index
    %34 = vector.load %arg4[%c0_21, %c0_22] : memref<32x64xf32, #tpu.memory_space<vmem>>, vector<32x64xf32>
    %cst_23 = arith.constant dense<0.000000e+00> : vector<2x64xf32>
    %35 = tpu.matmul %33, %34, %cst_23 {dimension_numbers = #tpu.dot_dimension_numbers<[1], [0], [0], [1], [0, 0, 1, 1], [], []>} : vector<2x32xf32>, vector<32x64xf32>, vector<2x64xf32> -> vector<2x64xf32>
    %c0_24 = arith.constant 0 : index
    %c0_25 = arith.constant 0 : index
    %36 = vector.load %arg5[%c0_24, %c0_25] : memref<1x64xf32, #tpu.memory_space<vmem>>, vector<1x64xf32>
    %37 = vector.broadcast %36 : vector<1x64xf32> to vector<2x64xf32>
    %38 = arith.addf %35, %37 : vector<2x64xf32>
    %cst_26 = arith.constant 0.000000e+00 : f32
    %39 = vector.broadcast %cst_26 : f32 to vector<2x64xf32>
    %40 = arith.maximumf %38, %39 : vector<2x64xf32>
    %c0_27 = arith.constant 0 : index
    %c0_28 = arith.constant 0 : index
    %41 = vector.load %arg6[%c0_27, %c0_28] : memref<64x32xf32, #tpu.memory_space<vmem>>, vector<64x32xf32>
    %cst_29 = arith.constant dense<0.000000e+00> : vector<2x32xf32>
    %42 = tpu.matmul %40, %41, %cst_29 {dimension_numbers = #tpu.dot_dimension_numbers<[1], [0], [0], [1], [0, 0, 1, 1], [], []>} : vector<2x64xf32>, vector<64x32xf32>, vector<2x32xf32> -> vector<2x32xf32>
    %c0_30 = arith.constant 0 : index
    %c0_31 = arith.constant 0 : index
    %43 = vector.load %arg7[%c0_30, %c0_31] : memref<1x32xf32, #tpu.memory_space<vmem>>, vector<1x32xf32>
    %44 = vector.broadcast %43 : vector<1x32xf32> to vector<2x32xf32>
    %45 = arith.addf %42, %44 : vector<2x32xf32>
    %46 = arith.negf %45 : vector<2x32xf32>
    %47 = math.exp %46 : vector<2x32xf32>
    %cst_32 = arith.constant 1.000000e+00 : f32
    %48 = vector.broadcast %cst_32 : f32 to vector<2x32xf32>
    %49 = arith.addf %48, %47 : vector<2x32xf32>
    %50 = arith.divf %48, %49 : vector<2x32xf32>
    %c0_33 = arith.constant 0 : index
    %c0_34 = arith.constant 0 : index
    %51 = vector.load %arg10[%c0_33, %c0_34] : memref<2x32xf32, #tpu.memory_space<vmem>>, vector<2x32xf32>
    tpu.vector_store %arg10[%c0_33, %c0_34], %50 {strides = array<i32>} : memref<2x32xf32, #tpu.memory_space<vmem>>, vector<2x32xf32>,
    %52 = vector.shape_cast %50 : vector<2x32xf32> to vector<1x2x32xf32>
    %53 = vector.broadcast %52 : vector<1x2x32xf32> to vector<16x2x32xf32>
    %54 = arith.mulf %0, %53 : vector<16x2x32xf32>
    %c0_35 = arith.constant 0 : index
    %c0_36 = arith.constant 0 : index
    %c0_37 = arith.constant 0 : index
    %55 = vector.load %arg8[%c0_35, %c0_36, %c0_37] : memref<16x2x32xf32, #tpu.memory_space<vmem>>, vector<16x2x32xf32>
    tpu.vector_store %arg8[%c0_35, %c0_36, %c0_37], %54 {strides = array<i32>} : memref<16x2x32xf32, #tpu.memory_space<vmem>>, vector<16x2x32xf32>,
    %56 = arith.subf %0, %54 : vector<16x2x32xf32>
    %c0_38 = arith.constant 0 : index
    %c0_39 = arith.constant 0 : index
    %c0_40 = arith.constant 0 : index
    %57 = vector.load %arg9[%c0_38, %c0_39, %c0_40] : memref<16x2x32xf32, #tpu.memory_space<vmem>>, vector<16x2x32xf32>
    tpu.vector_store %arg9[%c0_38, %c0_39, %c0_40], %56 {strides = array<i32>} : memref<16x2x32xf32, #tpu.memory_space<vmem>>, vector<16x2x32xf32>,
    return
  }
  func.func @transform_0(%arg0: i32) -> (i32, i32, i32) {
    %c0_i32 = arith.constant 0 : i32
    %c0_i32_0 = arith.constant 0 : i32
    %c0_i32_1 = arith.constant 0 : i32
    return %c0_i32, %arg0, %c0_i32_0 : i32, i32, i32
  }
  func.func @transform_1(%arg0: i32) -> (i32, i32, i32) {
    %c0_i32 = arith.constant 0 : i32
    %c0_i32_0 = arith.constant 0 : i32
    %c0_i32_1 = arith.constant 0 : i32
    %c0_i32_2 = arith.constant 0 : i32
    return %c0_i32, %c0_i32_0, %c0_i32_1 : i32, i32, i32
  }
  func.func @transform_2(%arg0: i32) -> (i32, i32) {
    %c0_i32 = arith.constant 0 : i32
    %c0_i32_0 = arith.constant 0 : i32
    %c0_i32_1 = arith.constant 0 : i32
    return %c0_i32, %c0_i32_0 : i32, i32
  }
  func.func @transform_3(%arg0: i32) -> (i32, i32) {
    %c0_i32 = arith.constant 0 : i32
    %c0_i32_0 = arith.constant 0 : i32
    %c0_i32_1 = arith.constant 0 : i32
    return %c0_i32, %c0_i32_0 : i32, i32
  }
  func.func @transform_4(%arg0: i32) -> (i32, i32) {
    %c0_i32 = arith.constant 0 : i32
    %c0_i32_0 = arith.constant 0 : i32
    %c0_i32_1 = arith.constant 0 : i32
    return %c0_i32, %c0_i32_0 : i32, i32
  }
  func.func @transform_5(%arg0: i32) -> (i32, i32) {
    %c0_i32 = arith.constant 0 : i32
    %c0_i32_0 = arith.constant 0 : i32
    %c0_i32_1 = arith.constant 0 : i32
    return %c0_i32, %c0_i32_0 : i32, i32
  }
  func.func @transform_6(%arg0: i32) -> (i32, i32) {
    %c0_i32 = arith.constant 0 : i32
    %c0_i32_0 = arith.constant 0 : i32
    %c0_i32_1 = arith.constant 0 : i32
    return %c0_i32, %c0_i32_0 : i32, i32
  }
  func.func @transform_7(%arg0: i32) -> (i32, i32, i32) {
    %c0_i32 = arith.constant 0 : i32
    %c0_i32_0 = arith.constant 0 : i32
    %c0_i32_1 = arith.constant 0 : i32
    return %c0_i32, %arg0, %c0_i32_0 : i32, i32, i32
  }
  func.func @transform_8(%arg0: i32) -> (i32, i32, i32) {
    %c0_i32 = arith.constant 0 : i32
    %c0_i32_0 = arith.constant 0 : i32
    %c0_i32_1 = arith.constant 0 : i32
    return %c0_i32, %arg0, %c0_i32_0 : i32, i32, i32
  }
  func.func @transform_9(%arg0: i32) -> (i32, i32) {
    %c0_i32 = arith.constant 0 : i32
    %c0_i32_0 = arith.constant 0 : i32
    return %arg0, %c0_i32 : i32, i32
  }
}

</mosaic_0001>

<llo_original>
// kernel: tpu_custom_call.1
$region0: #{tpu_custom_call.1}
  #allocation0 [shape = 'u32[]', space=smem, size = 0x4, offset = 0x4, fixed_abs, tag = 'smem constant byte address 0x4 - core index']
  #allocation1 [shape = 'u32[144,128]{1,0:T(1,128)}', space=vmem, size = 0x12000, scoped, tag = 'internal scratch']
  %s0 = inlined_call_operand.vmem [shape: f32[16,2,32], index: 0, kind: input, shape index: {}]
  %s1 = inlined_call_operand.hbm [shape: f32[5,32,32], index: 1, kind: input, shape index: {}]
  %s2 = inlined_call_operand.vmem [shape: f32[1,32], index: 2, kind: input, shape index: {}]
  %s3 = inlined_call_operand.vmem [shape: f32[32,64], index: 3, kind: input, shape index: {}]
  %s4 = inlined_call_operand.vmem [shape: f32[1,64], index: 4, kind: input, shape index: {}]
  %s5 = inlined_call_operand.vmem [shape: f32[64,32], index: 5, kind: input, shape index: {}]
  %s6 = inlined_call_operand.vmem [shape: f32[1,32], index: 6, kind: input, shape index: {}]
  %s7 = inlined_call_operand.hbm [shape: f32[16,2,32], index: 7, kind: output, shape index: {0}]
  %s8 = inlined_call_operand.hbm [shape: f32[16,2,32], index: 8, kind: output, shape index: {1}]
  %s9 = inlined_call_operand.hbm [shape: f32[2,32], index: 9, kind: output, shape index: {2}]
  %10 = xla_tuple %s7, %s8, %s9
  %s11 = sld [smem:[#allocation0]]
  $region58: #{tpu_custom_call.1} parent=0
    _
  %s13 = ssub.s32 1, %s11
  %s14 = scalar_select 0, %s13, %s11
  $region1: #{tpu_custom_call.1} parent=0
    #allocation2 [shape = 'u8[81920]{0}', space=vmem, size = 0x14000, scoped, tag = 'input window, operand 1, single buffered']
    #allocation3 [shape = 's32[1]{0}', space=sflag, size = 0x4, scoped, tag = 'scoped memory for tpu_custom_call.1']
    #allocation4 [shape = 's32[1]{0}', space=sflag, size = 0x4, scoped, tag = 'scoped memory for tpu_custom_call.1']
    #allocation5 [shape = 'u8[16384]{0}', space=vmem, size = 0x4000, scoped, tag = 'output window, operand 0, single buffered']
    #allocation6 [shape = 'u8[16384]{0}', space=vmem, size = 0x4000, scoped, tag = 'output window, operand 1, single buffered']
    #allocation7 [shape = 's32[1]{0}', space=sflag, size = 0x4, scoped, tag = 'scoped memory for tpu_custom_call.1']
    #allocation8 [shape = 'u8[1024]{0}', space=vmem, size = 0x400, scoped, tag = 'output window, operand 2, single buffered']
    %15 = vsyncpa [#allocation3], 0
    %16 = vsyncpa [#allocation4], 0
    %17 = vsyncpa [#allocation7], 0
    // Predicated region
    $region2: #{tpu_custom_call.1} parent=1 // pred_check
      _
    $region3: #{tpu_custom_call.1} parent=1 // pred_check_branch
      %19 = sbr.rel (0) target = $region5
    $region4: #{tpu_custom_call.1} parent=1 // pred_region
      _
    $region5: #{tpu_custom_call.1} parent=1 // pred_fallthru
      _
    // Predicated region
    $region6: #{tpu_custom_call.1} parent=1 // pred_check
      _
    $region7: #{tpu_custom_call.1} parent=1 // pred_check_branch
      %21 = sbr.rel (0) target = $region9
    $region8: #{tpu_custom_call.1} parent=1 // pred_region
      %s23 = ssub.s32 2560, 2560
      %24 = vsyncadd [#allocation3], %s23
      %s25 = sshll.u32 [#allocation2], 4
      %s26 = int_to_ptr.vmem [resolvable:$true] %s25
      %31 = dma.hbm_to_vmem [thread:$0]  %s1, 2560, %s26, [#allocation3], 128, 128, 8
    $region9: #{tpu_custom_call.1} parent=1 // pred_fallthru
      _
    // Predicated region
    $region10: #{tpu_custom_call.1} parent=1 // pred_check
      _
    $region11: #{tpu_custom_call.1} parent=1 // pred_check_branch
      %33 = sbr.rel (0) target = $region13
    $region12: #{tpu_custom_call.1} parent=1 // pred_region
      _
    $region13: #{tpu_custom_call.1} parent=1 // pred_fallthru
      _
    // Predicated region
    $region14: #{tpu_custom_call.1} parent=1 // pred_check
      _
    $region15: #{tpu_custom_call.1} parent=1 // pred_check_branch
      %35 = sbr.rel (0) target = $region17
    $region16: #{tpu_custom_call.1} parent=1 // pred_region
      _
    $region17: #{tpu_custom_call.1} parent=1 // pred_fallthru
      _
    // Predicated region
    $region18: #{tpu_custom_call.1} parent=1 // pred_check
      _
    $region19: #{tpu_custom_call.1} parent=1 // pred_check_branch
      %37 = sbr.rel (0) target = $region21
    $region20: #{tpu_custom_call.1} parent=1 // pred_region
      _
    $region21: #{tpu_custom_call.1} parent=1 // pred_fallthru
      _
    // Predicated region
    $region22: #{tpu_custom_call.1} parent=1 // pred_check
      _
    $region23: #{tpu_custom_call.1} parent=1 // pred_check_branch
      %39 = sbr.rel (0) target = $region25
    $region24: #{tpu_custom_call.1} parent=1 // pred_region
      _
    $region25: #{tpu_custom_call.1} parent=1 // pred_fallthru
      _
    // Predicated region
    $region26: #{tpu_custom_call.1} parent=1 // pred_check
      _
    $region27: #{tpu_custom_call.1} parent=1 // pred_check_branch
      %41 = sbr.rel (0) target = $region29
    $region28: #{tpu_custom_call.1} parent=1 // pred_region
      _
    $region29: #{tpu_custom_call.1} parent=1 // pred_fallthru
      _
    // Predicated region
    $region30: #{tpu_custom_call.1} parent=1 // pred_check
      _
    $region31: #{tpu_custom_call.1} parent=1 // pred_check_branch
      %43 = sbr.rel (0) target = $region33
    $region32: #{tpu_custom_call.1} parent=1 // pred_region
      %44 = dma.done [#allocation3], 2560
    $region33: #{tpu_custom_call.1} parent=1 // pred_fallthru
      _
    %v45 = vld [vmem:[%s0] sm:$0x3]
    %v46 = vld [vmem:[%s0 + $0x2] sm:$0x3]
    %v47 = vld [vmem:[%s0 + $0x4] sm:$0x3]
    %v48 = vld [vmem:[%s0 + $0x6] sm:$0x3]
    %v49 = vld [vmem:[%s0 + $0x8] sm:$0x3]
    %v50 = vld [vmem:[%s0 + $0xa] sm:$0x3]
    %v51 = vld [vmem:[%s0 + $0xc] sm:$0x3]
    %v52 = vld [vmem:[%s0 + $0xe] sm:$0x3]
    %v53 = vld [vmem:[%s0 + $0x10] sm:$0x3]
    %v54 = vld [vmem:[%s0 + $0x12] sm:$0x3]
    %v55 = vld [vmem:[%s0 + $0x14] sm:$0x3]
    %v56 = vld [vmem:[%s0 + $0x16] sm:$0x3]
    %v57 = vld [vmem:[%s0 + $0x18] sm:$0x3]
    %v58 = vld [vmem:[%s0 + $0x1a] sm:$0x3]
    %v59 = vld [vmem:[%s0 + $0x1c] sm:$0x3]
    %v60 = vld [vmem:[%s0 + $0x1e] sm:$0x3]
    %vm61 = vcmask 254976
    %v62 = vsel %vm61, %v45, 0.0
    %v63 = vsel %vm61, %v46, 0.0
    %v64 = vadd.f32 %v62, %v63
    %v65 = vsel %vm61, %v47, 0.0
    %v66 = vadd.f32 %v64, %v65
    %v67 = vsel %vm61, %v48, 0.0
    %v68 = vadd.f32 %v66, %v67
    %v69 = vsel %vm61, %v49, 0.0
    %v70 = vadd.f32 %v68, %v69
    %v71 = vsel %vm61, %v50, 0.0
    %v72 = vadd.f32 %v70, %v71
    %v73 = vsel %vm61, %v51, 0.0
    %v74 = vadd.f32 %v72, %v73
    %v75 = vsel %vm61, %v52, 0.0
    %v76 = vadd.f32 %v74, %v75
    %v77 = vsel %vm61, %v53, 0.0
    %v78 = vadd.f32 %v76, %v77
    %v79 = vsel %vm61, %v54, 0.0
    %v80 = vadd.f32 %v78, %v79
    %v81 = vsel %vm61, %v55, 0.0
    %v82 = vadd.f32 %v80, %v81
    %v83 = vsel %vm61, %v56, 0.0
    %v84 = vadd.f32 %v82, %v83
    %v85 = vsel %vm61, %v57, 0.0
    %v86 = vadd.f32 %v84, %v85
    %v87 = vsel %vm61, %v58, 0.0
    %v88 = vadd.f32 %v86, %v87
    %v89 = vsel %vm61, %v59, 0.0
    %v90 = vadd.f32 %v88, %v89
    %v91 = vsel %vm61, %v60, 0.0
    %v92 = vadd.f32 %v90, %v91
    %v93 = vld [vmem:[#allocation2] sm:$0xff]
    %v94 = vld [vmem:[#allocation2 + $0x8] sm:$0xff]
    %v95 = vld [vmem:[#allocation2 + $0x10] sm:$0xff]
    %v96 = vld [vmem:[#allocation2 + $0x18] sm:$0xff]
    %s97 = scalar_lea.vmem [#allocation2], 32
    %v98 = vld [vmem:[%s97] sm:$0xff]
    %v99 = vld [vmem:[%s97 + $0x8] sm:$0xff]
    %v100 = vld [vmem:[%s97 + $0x10] sm:$0xff]
    %v101 = vld [vmem:[%s97 + $0x18] sm:$0xff]
    %vm102 = vcmask 261120
    %v104 = vsel %vm102, %v45, 0
    %106 = vmatprep.subr.mxu0 0.0
    %107 = vmatpush1.msra.mxu0 0.0
    %108 = vmatprep.subr.mxu0 0.0
    %109 = vmatpush1.msra.mxu0 0.0
    %110 = vmatprep.subr.mxu0 0.0
    %111 = vmatpush1.msra.mxu0 0.0
    %112 = vmatprep.subr.mxu0 0.0
    %113 = vmatpush1.msra.mxu0 0.0
    %114 = vmatprep.subr.mxu0 0.0
    %115 = vmatpush1.msra.mxu0 0.0
    %116 = vmatprep.subr.mxu0 0.0
    %117 = vmatpush1.msra.mxu0 0.0
    %118 = vmatprep.subr.mxu0 0.0
    %119 = vmatpush1.msra.mxu0 0.0
    %120 = vmatprep.subr.mxu0 0.0
    %121 = vmatpush1.msra.mxu0 0.0
    %122 = vmatprep.subr.mxu0 0.0
    %123 = vmatpush1.msra.mxu0 0.0
    %124 = vmatprep.subr.mxu0 0.0
    %125 = vmatpush1.msra.mxu0 0.0
    %126 = vmatprep.subr.mxu0 0.0
    %127 = vmatpush1.msra.mxu0 0.0
    %128 = vmatprep.subr.mxu0 0.0
    %129 = vmatpush1.msra.mxu0 0.0
    %130 = vmatprep.subr.mxu0 0.0
    %131 = vmatpush1.msra.mxu0 %v101
    %132 = vmatprep.subr.mxu0 0.0
    %133 = vmatpush1.msra.mxu0 %v100
    %134 = vmatprep.subr.mxu0 0.0
    %135 = vmatpush1.msra.mxu0 %v99
    %136 = vmatprep.subr.mxu0 0.0
    %137 = vmatpush1.msra.mxu0 %v98
    %138 = vmatprep.subr.mxu0 0.0
    %139 = vmatpush2.msra.mxu0 0.0
    %140 = vmatprep.subr.mxu0 0.0
    %141 = vmatpush2.msra.mxu0 0.0
    %142 = vmatprep.subr.mxu0 0.0
    %143 = vmatpush2.msra.mxu0 0.0
    %144 = vmatprep.subr.mxu0 0.0
    %145 = vmatpush2.msra.mxu0 0.0
    %146 = vmatprep.subr.mxu0 0.0
    %147 = vmatpush2.msra.mxu0 0.0
    %148 = vmatprep.subr.mxu0 0.0
    %149 = vmatpush2.msra.mxu0 0.0
    %150 = vmatprep.subr.mxu0 0.0
    %151 = vmatpush2.msra.mxu0 0.0
    %152 = vmatprep.subr.mxu0 0.0
    %153 = vmatpush2.msra.mxu0 0.0
    %154 = vmatprep.subr.mxu0 0.0
    %155 = vmatpush2.msra.mxu0 0.0
    %156 = vmatprep.subr.mxu0 0.0
    %157 = vmatpush2.msra.mxu0 0.0
    %158 = vmatprep.subr.mxu0 0.0
    %159 = vmatpush2.msra.mxu0 0.0
    %160 = vmatprep.subr.mxu0 0.0
    %161 = vmatpush2.msra.mxu0 0.0
    %162 = vmatprep.subr.mxu0 0.0
    %163 = vmatpush2.msra.mxu0 0.0
    %164 = vmatprep.subr.mxu0 0.0
    %165 = vmatpush2.msra.mxu0 0.0
    %166 = vmatprep.subr.mxu0 0.0
    %167 = vmatpush2.msra.mxu0 0.0
    %168 = vmatprep.subr.mxu0 0.0
    %169 = vmatpush2.msra.mxu0 0.0
    %170 = vmatprep.mubr.f32.mxu0 0.0
    %171 = vmatmul.mubr.f32.gmra.mxu0 %v104
    %v172 = vpop.f32.mrf.mxu0
    %v173 = vadd.f32 0.0, %v172
    %v174 = vpop.f32.mrf.mxu0
    %175 = vdwg.mxu0
    %v177 = vsel %vm102, %v92, 0
    %179 = vmatprep.subr.mxu0 0.0
    %180 = vmatpush1.msra.mxu0 0.0
    %181 = vmatprep.subr.mxu0 0.0
    %182 = vmatpush1.msra.mxu0 0.0
    %183 = vmatprep.subr.mxu0 0.0
    %184 = vmatpush1.msra.mxu0 0.0
    %185 = vmatprep.subr.mxu0 0.0
    %186 = vmatpush1.msra.mxu0 0.0
    %187 = vmatprep.subr.mxu0 0.0
    %188 = vmatpush1.msra.mxu0 0.0
    %189 = vmatprep.subr.mxu0 0.0
    %190 = vmatpush1.msra.mxu0 0.0
    %191 = vmatprep.subr.mxu0 0.0
    %192 = vmatpush1.msra.mxu0 0.0
    %193 = vmatprep.subr.mxu0 0.0
    %194 = vmatpush1.msra.mxu0 0.0
    %195 = vmatprep.subr.mxu0 0.0
    %196 = vmatpush1.msra.mxu0 0.0
    %197 = vmatprep.subr.mxu0 0.0
    %198 = vmatpush1.msra.mxu0 0.0
    %199 = vmatprep.subr.mxu0 0.0
    %200 = vmatpush1.msra.mxu0 0.0
    %201 = vmatprep.subr.mxu0 0.0
    %202 = vmatpush1.msra.mxu0 0.0
    %203 = vmatprep.subr.mxu0 0.0
    %204 = vmatpush1.msra.mxu0 %v96
    %205 = vmatprep.subr.mxu0 0.0
    %206 = vmatpush1.msra.mxu0 %v95
    %207 = vmatprep.subr.mxu0 0.0
    %208 = vmatpush1.msra.mxu0 %v94
    %209 = vmatprep.subr.mxu0 0.0
    %210 = vmatpush1.msra.mxu0 %v93
    %211 = vmatprep.subr.mxu0 0.0
    %212 = vmatpush2.msra.mxu0 0.0
    %213 = vmatprep.subr.mxu0 0.0
    %214 = vmatpush2.msra.mxu0 0.0
    %215 = vmatprep.subr.mxu0 0.0
    %216 = vmatpush2.msra.mxu0 0.0
    %217 = vmatprep.subr.mxu0 0.0
    %218 = vmatpush2.msra.mxu0 0.0
    %219 = vmatprep.subr.mxu0 0.0
    %220 = vmatpush2.msra.mxu0 0.0
    %221 = vmatprep.subr.mxu0 0.0
    %222 = vmatpush2.msra.mxu0 0.0
    %223 = vmatprep.subr.mxu0 0.0
    %224 = vmatpush2.msra.mxu0 0.0
    %225 = vmatprep.subr.mxu0 0.0
    %226 = vmatpush2.msra.mxu0 0.0
    %227 = vmatprep.subr.mxu0 0.0
    %228 = vmatpush2.msra.mxu0 0.0
    %229 = vmatprep.subr.mxu0 0.0
    %230 = vmatpush2.msra.mxu0 0.0
    %231 = vmatprep.subr.mxu0 0.0
    %232 = vmatpush2.msra.mxu0 0.0
    %233 = vmatprep.subr.mxu0 0.0
    %234 = vmatpush2.msra.mxu0 0.0
    %235 = vmatprep.subr.mxu0 0.0
    %236 = vmatpush2.msra.mxu0 0.0
    %237 = vmatprep.subr.mxu0 0.0
    %238 = vmatpush2.msra.mxu0 0.0
    %239 = vmatprep.subr.mxu0 0.0
    %240 = vmatpush2.msra.mxu0 0.0
    %241 = vmatprep.subr.mxu0 0.0
    %242 = vmatpush2.msra.mxu0 0.0
    %243 = vmatprep.mubr.f32.mxu0 0.0
    %244 = vmatmul.mubr.f32.gmra.mxu0 %v177
    %v245 = vpop.f32.mrf.mxu0
    %v246 = vadd.f32 %v173, %v245
    %v247 = vpop.f32.mrf.mxu0
    %248 = vdwg.mxu0
    %s249 = scalar_lea.vmem [#allocation2], 64
    %v250 = vld [vmem:[%s249] sm:$0xff]
    %v251 = vld [vmem:[%s249 + $0x8] sm:$0xff]
    %v252 = vld [vmem:[%s249 + $0x10] sm:$0xff]
    %v253 = vld [vmem:[%s249 + $0x18] sm:$0xff]
    %v255 = vsel %vm102, %v46, 0
    %257 = vmatprep.subr.mxu0 0.0
    %258 = vmatpush1.msra.mxu0 0.0
    %259 = vmatprep.subr.mxu0 0.0
    %260 = vmatpush1.msra.mxu0 0.0
    %261 = vmatprep.subr.mxu0 0.0
    %262 = vmatpush1.msra.mxu0 0.0
    %263 = vmatprep.subr.mxu0 0.0
    %264 = vmatpush1.msra.mxu0 0.0
    %265 = vmatprep.subr.mxu0 0.0
    %266 = vmatpush1.msra.mxu0 0.0
    %267 = vmatprep.subr.mxu0 0.0
    %268 = vmatpush1.msra.mxu0 0.0
    %269 = vmatprep.subr.mxu0 0.0
    %270 = vmatpush1.msra.mxu0 0.0
    %271 = vmatprep.subr.mxu0 0.0
    %272 = vmatpush1.msra.mxu0 0.0
    %273 = vmatprep.subr.mxu0 0.0
    %274 = vmatpush1.msra.mxu0 0.0
    %275 = vmatprep.subr.mxu0 0.0
    %276 = vmatpush1.msra.mxu0 0.0
    %277 = vmatprep.subr.mxu0 0.0
    %278 = vmatpush1.msra.mxu0 0.0
    %279 = vmatprep.subr.mxu0 0.0
    %280 = vmatpush1.msra.mxu0 0.0
    %281 = vmatprep.subr.mxu0 0.0
    %282 = vmatpush1.msra.mxu0 %v253
    %283 = vmatprep.subr.mxu0 0.0
    %284 = vmatpush1.msra.mxu0 %v252
    %285 = vmatprep.subr.mxu0 0.0
    %286 = vmatpush1.msra.mxu0 %v251
    %287 = vmatprep.subr.mxu0 0.0
    %288 = vmatpush1.msra.mxu0 %v250
    %289 = vmatprep.subr.mxu0 0.0
    %290 = vmatpush2.msra.mxu0 0.0
    %291 = vmatprep.subr.mxu0 0.0
    %292 = vmatpush2.msra.mxu0 0.0
    %293 = vmatprep.subr.mxu0 0.0
    %294 = vmatpush2.msra.mxu0 0.0
    %295 = vmatprep.subr.mxu0 0.0
    %296 = vmatpush2.msra.mxu0 0.0
    %297 = vmatprep.subr.mxu0 0.0
    %298 = vmatpush2.msra.mxu0 0.0
    %299 = vmatprep.subr.mxu0 0.0
    %300 = vmatpush2.msra.mxu0 0.0
    %301 = vmatprep.subr.mxu0 0.0
    %302 = vmatpush2.msra.mxu0 0.0
    %303 = vmatprep.subr.mxu0 0.0
    %304 = vmatpush2.msra.mxu0 0.0
    %305 = vmatprep.subr.mxu0 0.0
    %306 = vmatpush2.msra.mxu0 0.0
    %307 = vmatprep.subr.mxu0 0.0
    %308 = vmatpush2.msra.mxu0 0.0
    %309 = vmatprep.subr.mxu0 0.0
    %310 = vmatpush2.msra.mxu0 0.0
    %311 = vmatprep.subr.mxu0 0.0
    %312 = vmatpush2.msra.mxu0 0.0
    %313 = vmatprep.subr.mxu0 0.0
    %314 = vmatpush2.msra.mxu0 0.0
    %315 = vmatprep.subr.mxu0 0.0
    %316 = vmatpush2.msra.mxu0 0.0
    %317 = vmatprep.subr.mxu0 0.0
    %318 = vmatpush2.msra.mxu0 0.0
    %319 = vmatprep.subr.mxu0 0.0
    %320 = vmatpush2.msra.mxu0 0.0
    %321 = vmatprep.mubr.f32.mxu0 0.0
    %322 = vmatmul.mubr.f32.gmra.mxu0 %v255
    %v323 = vpop.f32.mrf.mxu0
    %v324 = vadd.f32 0.0, %v323
    %v325 = vpop.f32.mrf.mxu0
    %326 = vdwg.mxu0
    %v327 = vadd.f32 %v246, %v324
    %s328 = scalar_lea.vmem [#allocation2], 96
    %v329 = vld [vmem:[%s328] sm:$0xff]
    %v330 = vld [vmem:[%s328 + $0x8] sm:$0xff]
    %v331 = vld [vmem:[%s328 + $0x10] sm:$0xff]
    %v332 = vld [vmem:[%s328 + $0x18] sm:$0xff]
    %v334 = vsel %vm102, %v59, 0
    %336 = vmatprep.subr.mxu0 0.0
    %337 = vmatpush1.msra.mxu0 0.0
    %338 = vmatprep.subr.mxu0 0.0
    %339 = vmatpush1.msra.mxu0 0.0
    %340 = vmatprep.subr.mxu0 0.0
    %341 = vmatpush1.msra.mxu0 0.0
    %342 = vmatprep.subr.mxu0 0.0
    %343 = vmatpush1.msra.mxu0 0.0
    %344 = vmatprep.subr.mxu0 0.0
    %345 = vmatpush1.msra.mxu0 0.0
    %346 = vmatprep.subr.mxu0 0.0
    %347 = vmatpush1.msra.mxu0 0.0
    %348 = vmatprep.subr.mxu0 0.0
    %349 = vmatpush1.msra.mxu0 0.0
    %350 = vmatprep.subr.mxu0 0.0
    %351 = vmatpush1.msra.mxu0 0.0
    %352 = vmatprep.subr.mxu0 0.0
    %353 = vmatpush1.msra.mxu0 0.0
    %354 = vmatprep.subr.mxu0 0.0
    %355 = vmatpush1.msra.mxu0 0.0
    %356 = vmatprep.subr.mxu0 0.0
    %357 = vmatpush1.msra.mxu0 0.0
    %358 = vmatprep.subr.mxu0 0.0
    %359 = vmatpush1.msra.mxu0 0.0
    %360 = vmatprep.subr.mxu0 0.0
    %361 = vmatpush1.msra.mxu0 %v332
    %362 = vmatprep.subr.mxu0 0.0
    %363 = vmatpush1.msra.mxu0 %v331
    %364 = vmatprep.subr.mxu0 0.0
    %365 = vmatpush1.msra.mxu0 %v330
    %366 = vmatprep.subr.mxu0 0.0
    %367 = vmatpush1.msra.mxu0 %v329
    %368 = vmatprep.subr.mxu0 0.0
    %369 = vmatpush2.msra.mxu0 0.0
    %370 = vmatprep.subr.mxu0 0.0
    %371 = vmatpush2.msra.mxu0 0.0
    %372 = vmatprep.subr.mxu0 0.0
    %373 = vmatpush2.msra.mxu0 0.0
    %374 = vmatprep.subr.mxu0 0.0
    %375 = vmatpush2.msra.mxu0 0.0
    %376 = vmatprep.subr.mxu0 0.0
    %377 = vmatpush2.msra.mxu0 0.0
    %378 = vmatprep.subr.mxu0 0.0
    %379 = vmatpush2.msra.mxu0 0.0
    %380 = vmatprep.subr.mxu0 0.0
    %381 = vmatpush2.msra.mxu0 0.0
    %382 = vmatprep.subr.mxu0 0.0
    %383 = vmatpush2.msra.mxu0 0.0
    %384 = vmatprep.subr.mxu0 0.0
    %385 = vmatpush2.msra.mxu0 0.0
    %386 = vmatprep.subr.mxu0 0.0
    %387 = vmatpush2.msra.mxu0 0.0
    %388 = vmatprep.subr.mxu0 0.0
    %389 = vmatpush2.msra.mxu0 0.0
    %390 = vmatprep.subr.mxu0 0.0
    %391 = vmatpush2.msra.mxu0 0.0
    %392 = vmatprep.subr.mxu0 0.0
    %393 = vmatpush2.msra.mxu0 0.0
    %394 = vmatprep.subr.mxu0 0.0
    %395 = vmatpush2.msra.mxu0 0.0
    %396 = vmatprep.subr.mxu0 0.0
    %397 = vmatpush2.msra.mxu0 0.0
    %398 = vmatprep.subr.mxu0 0.0
    %399 = vmatpush2.msra.mxu0 0.0
    %400 = vmatprep.mubr.f32.mxu0 0.0
    %401 = vmatmul.mubr.f32.gmra.mxu0 %v334
    %v402 = vpop.f32.mrf.mxu0
    %v403 = vadd.f32 0.0, %v402
    %v404 = vpop.f32.mrf.mxu0
    %405 = vdwg.mxu0
    %v406 = vadd.f32 %v327, %v403
    %s407 = scalar_lea.vmem [#allocation2], 128
    %v408 = vld [vmem:[%s407] sm:$0xff]
    %v409 = vld [vmem:[%s407 + $0x8] sm:$0xff]
    %v410 = vld [vmem:[%s407 + $0x10] sm:$0xff]
    %v411 = vld [vmem:[%s407 + $0x18] sm:$0xff]
    %v413 = vsel %vm102, %v60, 0
    %415 = vmatprep.subr.mxu0 0.0
    %416 = vmatpush1.msra.mxu0 0.0
    %417 = vmatprep.subr.mxu0 0.0
    %418 = vmatpush1.msra.mxu0 0.0
    %419 = vmatprep.subr.mxu0 0.0
    %420 = vmatpush1.msra.mxu0 0.0
    %421 = vmatprep.subr.mxu0 0.0
    %422 = vmatpush1.msra.mxu0 0.0
    %423 = vmatprep.subr.mxu0 0.0
    %424 = vmatpush1.msra.mxu0 0.0
    %425 = vmatprep.subr.mxu0 0.0
    %426 = vmatpush1.msra.mxu0 0.0
    %427 = vmatprep.subr.mxu0 0.0
    %428 = vmatpush1.msra.mxu0 0.0
    %429 = vmatprep.subr.mxu0 0.0
    %430 = vmatpush1.msra.mxu0 0.0
    %431 = vmatprep.subr.mxu0 0.0
    %432 = vmatpush1.msra.mxu0 0.0
    %433 = vmatprep.subr.mxu0 0.0
    %434 = vmatpush1.msra.mxu0 0.0
    %435 = vmatprep.subr.mxu0 0.0
    %436 = vmatpush1.msra.mxu0 0.0
    %437 = vmatprep.subr.mxu0 0.0
    %438 = vmatpush1.msra.mxu0 0.0
    %439 = vmatprep.subr.mxu0 0.0
    %440 = vmatpush1.msra.mxu0 %v411
    %441 = vmatprep.subr.mxu0 0.0
    %442 = vmatpush1.msra.mxu0 %v410
    %443 = vmatprep.subr.mxu0 0.0
    %444 = vmatpush1.msra.mxu0 %v409
    %445 = vmatprep.subr.mxu0 0.0
    %446 = vmatpush1.msra.mxu0 %v408
    %447 = vmatprep.subr.mxu0 0.0
    %448 = vmatpush2.msra.mxu0 0.0
    %449 = vmatprep.subr.mxu0 0.0
    %450 = vmatpush2.msra.mxu0 0.0
    %451 = vmatprep.subr.mxu0 0.0
    %452 = vmatpush2.msra.mxu0 0.0
    %453 = vmatprep.subr.mxu0 0.0
    %454 = vmatpush2.msra.mxu0 0.0
    %455 = vmatprep.subr.mxu0 0.0
    %456 = vmatpush2.msra.mxu0 0.0
    %457 = vmatprep.subr.mxu0 0.0
    %458 = vmatpush2.msra.mxu0 0.0
    %459 = vmatprep.subr.mxu0 0.0
    %460 = vmatpush2.msra.mxu0 0.0
    %461 = vmatprep.subr.mxu0 0.0
    %462 = vmatpush2.msra.mxu0 0.0
    %463 = vmatprep.subr.mxu0 0.0
    %464 = vmatpush2.msra.mxu0 0.0
    %465 = vmatprep.subr.mxu0 0.0
    %466 = vmatpush2.msra.mxu0 0.0
    %467 = vmatprep.subr.mxu0 0.0
    %468 = vmatpush2.msra.mxu0 0.0
    %469 = vmatprep.subr.mxu0 0.0
    %470 = vmatpush2.msra.mxu0 0.0
    %471 = vmatprep.subr.mxu0 0.0
    %472 = vmatpush2.msra.mxu0 0.0
    %473 = vmatprep.subr.mxu0 0.0
    %474 = vmatpush2.msra.mxu0 0.0
    %475 = vmatprep.subr.mxu0 0.0
    %476 = vmatpush2.msra.mxu0 0.0
    %477 = vmatprep.subr.mxu0 0.0
    %478 = vmatpush2.msra.mxu0 0.0
    %479 = vmatprep.mubr.f32.mxu0 0.0
    %480 = vmatmul.mubr.f32.gmra.mxu0 %v413
    %v481 = vpop.f32.mrf.mxu0
    %v482 = vadd.f32 0.0, %v481
    %v483 = vpop.f32.mrf.mxu0
    %484 = vdwg.mxu0
    %v485 = vadd.f32 %v406, %v482
    %v486 = vld [vmem:[%s2] sm:$0x1]
    %v487 = vmul.f32 %v485, 0.0625
    %v489 = vlaneseq
    %v490 = vshrl.u32 %v489, 7
    %v491 = vsub.s32 0, %v490
    %v492 = vrot.slane %v486, %v491
    %v494 = vadd.f32 %v492, %v487
    %v495 = vld [vmem:[%s3] sm:$0xff]
    %v496 = vld [vmem:[%s3 + $0x8] sm:$0xff]
    %v497 = vld [vmem:[%s3 + $0x10] sm:$0xff]
    %v498 = vld [vmem:[%s3 + $0x18] sm:$0xff]
    %v499 = vld [vmem:[%s4] sm:$0x1]
    %v501 = vlaneseq
    %v502 = vshrl.u32 %v501, 7
    %v503 = vsub.s32 0, %v502
    %v504 = vrot.slane %v499, %v503
    %v507 = vsel %vm102, %v494, 0
    %509 = vmatprep.subr.mxu0 0.0
    %510 = vmatpush1.msra.mxu0 0.0
    %511 = vmatprep.subr.mxu0 0.0
    %512 = vmatpush1.msra.mxu0 0.0
    %513 = vmatprep.subr.mxu0 0.0
    %514 = vmatpush1.msra.mxu0 0.0
    %515 = vmatprep.subr.mxu0 0.0
    %516 = vmatpush1.msra.mxu0 0.0
    %517 = vmatprep.subr.mxu0 0.0
    %518 = vmatpush1.msra.mxu0 0.0
    %519 = vmatprep.subr.mxu0 0.0
    %520 = vmatpush1.msra.mxu0 0.0
    %521 = vmatprep.subr.mxu0 0.0
    %522 = vmatpush1.msra.mxu0 0.0
    %523 = vmatprep.subr.mxu0 0.0
    %524 = vmatpush1.msra.mxu0 0.0
    %525 = vmatprep.subr.mxu0 0.0
    %526 = vmatpush1.msra.mxu0 0.0
    %527 = vmatprep.subr.mxu0 0.0
    %528 = vmatpush1.msra.mxu0 0.0
    %529 = vmatprep.subr.mxu0 0.0
    %530 = vmatpush1.msra.mxu0 0.0
    %531 = vmatprep.subr.mxu0 0.0
    %532 = vmatpush1.msra.mxu0 0.0
    %533 = vmatprep.subr.mxu0 0.0
    %534 = vmatpush1.msra.mxu0 %v498
    %535 = vmatprep.subr.mxu0 0.0
    %536 = vmatpush1.msra.mxu0 %v497
    %537 = vmatprep.subr.mxu0 0.0
    %538 = vmatpush1.msra.mxu0 %v496
    %539 = vmatprep.subr.mxu0 0.0
    %540 = vmatpush1.msra.mxu0 %v495
    %541 = vmatprep.subr.mxu0 0.0
    %542 = vmatpush2.msra.mxu0 0.0
    %543 = vmatprep.subr.mxu0 0.0
    %544 = vmatpush2.msra.mxu0 0.0
    %545 = vmatprep.subr.mxu0 0.0
    %546 = vmatpush2.msra.mxu0 0.0
    %547 = vmatprep.subr.mxu0 0.0
    %548 = vmatpush2.msra.mxu0 0.0
    %549 = vmatprep.subr.mxu0 0.0
    %550 = vmatpush2.msra.mxu0 0.0
    %551 = vmatprep.subr.mxu0 0.0
    %552 = vmatpush2.msra.mxu0 0.0
    %553 = vmatprep.subr.mxu0 0.0
    %554 = vmatpush2.msra.mxu0 0.0
    %555 = vmatprep.subr.mxu0 0.0
    %556 = vmatpush2.msra.mxu0 0.0
    %557 = vmatprep.subr.mxu0 0.0
    %558 = vmatpush2.msra.mxu0 0.0
    %559 = vmatprep.subr.mxu0 0.0
    %560 = vmatpush2.msra.mxu0 0.0
    %561 = vmatprep.subr.mxu0 0.0
    %562 = vmatpush2.msra.mxu0 0.0
    %563 = vmatprep.subr.mxu0 0.0
    %564 = vmatpush2.msra.mxu0 0.0
    %565 = vmatprep.subr.mxu0 0.0
    %566 = vmatpush2.msra.mxu0 0.0
    %567 = vmatprep.subr.mxu0 0.0
    %568 = vmatpush2.msra.mxu0 0.0
    %569 = vmatprep.subr.mxu0 0.0
    %570 = vmatpush2.msra.mxu0 0.0
    %571 = vmatprep.subr.mxu0 0.0
    %572 = vmatpush2.msra.mxu0 0.0
    %573 = vmatprep.mubr.f32.mxu0 0.0
    %574 = vmatmul.mubr.f32.gmra.mxu0 %v507
    %v575 = vpop.f32.mrf.mxu0
    %v576 = vadd.f32 %v504, %v575
    %v577 = vpop.f32.mrf.mxu0
    %578 = vdwg.mxu0
    %v579 = vmax.f32 %v576, 0.0
    %v580 = vld [vmem:[%s5] sm:$0xff]
    %v581 = vld [vmem:[%s5 + $0x8] sm:$0xff]
    %v582 = vld [vmem:[%s5 + $0x10] sm:$0xff]
    %v583 = vld [vmem:[%s5 + $0x18] sm:$0xff]
    %v584 = vld [vmem:[%s5 + $0x20] sm:$0xff]
    %v585 = vld [vmem:[%s5 + $0x28] sm:$0xff]
    %v586 = vld [vmem:[%s5 + $0x30] sm:$0xff]
    %v587 = vld [vmem:[%s5 + $0x38] sm:$0xff]
    %v588 = vld [vmem:[%s6] sm:$0x1]
    %v590 = vlaneseq
    %v591 = vshrl.u32 %v590, 7
    %v592 = vsub.s32 0, %v591
    %v593 = vrot.slane %v588, %v592
    %vm595 = vcmask 523264
    %v597 = vsel %vm595, %v579, 0
    %599 = vmatprep.subr.mxu0 0.0
    %600 = vmatpush1.msra.mxu0 0.0
    %601 = vmatprep.subr.mxu0 0.0
    %602 = vmatpush1.msra.mxu0 0.0
    %603 = vmatprep.subr.mxu0 0.0
    %604 = vmatpush1.msra.mxu0 0.0
    %605 = vmatprep.subr.mxu0 0.0
    %606 = vmatpush1.msra.mxu0 0.0
    %607 = vmatprep.subr.mxu0 0.0
    %608 = vmatpush1.msra.mxu0 0.0
    %609 = vmatprep.subr.mxu0 0.0
    %610 = vmatpush1.msra.mxu0 0.0
    %611 = vmatprep.subr.mxu0 0.0
    %612 = vmatpush1.msra.mxu0 0.0
    %613 = vmatprep.subr.mxu0 0.0
    %614 = vmatpush1.msra.mxu0 0.0
    %615 = vmatprep.subr.mxu0 0.0
    %616 = vmatpush1.msra.mxu0 %v587
    %617 = vmatprep.subr.mxu0 0.0
    %618 = vmatpush1.msra.mxu0 %v586
    %619 = vmatprep.subr.mxu0 0.0
    %620 = vmatpush1.msra.mxu0 %v585
    %621 = vmatprep.subr.mxu0 0.0
    %622 = vmatpush1.msra.mxu0 %v584
    %623 = vmatprep.subr.mxu0 0.0
    %624 = vmatpush1.msra.mxu0 %v583
    %625 = vmatprep.subr.mxu0 0.0
    %626 = vmatpush1.msra.mxu0 %v582
    %627 = vmatprep.subr.mxu0 0.0
    %628 = vmatpush1.msra.mxu0 %v581
    %629 = vmatprep.subr.mxu0 0.0
    %630 = vmatpush1.msra.mxu0 %v580
    %631 = vmatprep.subr.mxu0 0.0
    %632 = vmatpush2.msra.mxu0 0.0
    %633 = vmatprep.subr.mxu0 0.0
    %634 = vmatpush2.msra.mxu0 0.0
    %635 = vmatprep.subr.mxu0 0.0
    %636 = vmatpush2.msra.mxu0 0.0
    %637 = vmatprep.subr.mxu0 0.0
    %638 = vmatpush2.msra.mxu0 0.0
    %639 = vmatprep.subr.mxu0 0.0
    %640 = vmatpush2.msra.mxu0 0.0
    %641 = vmatprep.subr.mxu0 0.0
    %642 = vmatpush2.msra.mxu0 0.0
    %643 = vmatprep.subr.mxu0 0.0
    %644 = vmatpush2.msra.mxu0 0.0
    %645 = vmatprep.subr.mxu0 0.0
    %646 = vmatpush2.msra.mxu0 0.0
    %647 = vmatprep.subr.mxu0 0.0
    %648 = vmatpush2.msra.mxu0 0.0
    %649 = vmatprep.subr.mxu0 0.0
    %650 = vmatpush2.msra.mxu0 0.0
    %651 = vmatprep.subr.mxu0 0.0
    %652 = vmatpush2.msra.mxu0 0.0
    %653 = vmatprep.subr.mxu0 0.0
    %654 = vmatpush2.msra.mxu0 0.0
    %655 = vmatprep.subr.mxu0 0.0
    %656 = vmatpush2.msra.mxu0 0.0
    %657 = vmatprep.subr.mxu0 0.0
    %658 = vmatpush2.msra.mxu0 0.0
    %659 = vmatprep.subr.mxu0 0.0
    %660 = vmatpush2.msra.mxu0 0.0
    %661 = vmatprep.subr.mxu0 0.0
    %662 = vmatpush2.msra.mxu0 0.0
    %663 = vmatprep.mubr.f32.mxu0 0.0
    %664 = vmatmul.mubr.f32.gmra.mxu0 %v597
    %v665 = vpop.f32.mrf.mxu0
    %v666 = vadd.f32 %v593, %v665
    %v667 = vpop.f32.mrf.mxu0
    %668 = vdwg.mxu0
    %v669 = vxor.u32 %v666, 2147483648
    %v670 = vmul.f32 %v669, 1.442695
    %v671 = vpow.pop %v670
    %v672 = vadd.f32 %v671, 1.0
    %v673 = vrcp.pop %v672
    %v674 = vmul.f32 1.0, %v673
    %675 = vst.msk [vmem:[#allocation8] sm:$0x3] %vm61, %v674
    %v676 = vmul.f32 %v45, %v674
    %v677 = vmul.f32 %v46, %v674
    %v678 = vmul.f32 %v47, %v674
    %v679 = vmul.f32 %v48, %v674
    %v680 = vmul.f32 %v49, %v674
    %v681 = vmul.f32 %v50, %v674
    %v682 = vmul.f32 %v51, %v674
    %v683 = vmul.f32 %v52, %v674
    %v684 = vmul.f32 %v53, %v674
    %v685 = vmul.f32 %v54, %v674
    %v686 = vmul.f32 %v55, %v674
    %v687 = vmul.f32 %v56, %v674
    %v688 = vmul.f32 %v57, %v674
    %v689 = vmul.f32 %v58, %v674
    %v690 = vmul.f32 %v59, %v674
    %v691 = vmul.f32 %v60, %v674
    %692 = vst.msk [vmem:[#allocation5] sm:$0x3] %vm61, %v676
    %693 = vst.msk [vmem:[#allocation5 + $0x2] sm:$0x3] %vm61, %v677
    %694 = vst.msk [vmem:[#allocation5 + $0x4] sm:$0x3] %vm61, %v678
    %695 = vst.msk [vmem:[#allocation5 + $0x6] sm:$0x3] %vm61, %v679
    %696 = vst.msk [vmem:[#allocation5 + $0x8] sm:$0x3] %vm61, %v680
    %697 = vst.msk [vmem:[#allocation5 + $0xa] sm:$0x3] %vm61, %v681
    %698 = vst.msk [vmem:[#allocation5 + $0xc] sm:$0x3] %vm61, %v682
    %699 = vst.msk [vmem:[#allocation5 + $0xe] sm:$0x3] %vm61, %v683
    %700 = vst.msk [vmem:[#allocation5 + $0x10] sm:$0x3] %vm61, %v684
    %701 = vst.msk [vmem:[#allocation5 + $0x12] sm:$0x3] %vm61, %v685
    %702 = vst.msk [vmem:[#allocation5 + $0x14] sm:$0x3] %vm61, %v686
    %703 = vst.msk [vmem:[#allocation5 + $0x16] sm:$0x3] %vm61, %v687
    %704 = vst.msk [vmem:[#allocation5 + $0x18] sm:$0x3] %vm61, %v688
    %705 = vst.msk [vmem:[#allocation5 + $0x1a] sm:$0x3] %vm61, %v689
    %706 = vst.msk [vmem:[#allocation5 + $0x1c] sm:$0x3] %vm61, %v690
    %707 = vst.msk [vmem:[#allocation5 + $0x1e] sm:$0x3] %vm61, %v691
    %v708 = vsub.f32 %v45, %v676
    %v709 = vsub.f32 %v46, %v677
    %v710 = vsub.f32 %v47, %v678
    %v711 = vsub.f32 %v48, %v679
    %v712 = vsub.f32 %v49, %v680
    %v713 = vsub.f32 %v50, %v681
    %v714 = vsub.f32 %v51, %v682
    %v715 = vsub.f32 %v52, %v683
    %v716 = vsub.f32 %v53, %v684
    %v717 = vsub.f32 %v54, %v685
    %v718 = vsub.f32 %v55, %v686
    %v719 = vsub.f32 %v56, %v687
    %v720 = vsub.f32 %v57, %v688
    %v721 = vsub.f32 %v58, %v689
    %v722 = vsub.f32 %v59, %v690
    %v723 = vsub.f32 %v60, %v691
    %724 = vst.msk [vmem:[#allocation6] sm:$0x3] %vm61, %v708
    %725 = vst.msk [vmem:[#allocation6 + $0x2] sm:$0x3] %vm61, %v709
    %726 = vst.msk [vmem:[#allocation6 + $0x4] sm:$0x3] %vm61, %v710
    %727 = vst.msk [vmem:[#allocation6 + $0x6] sm:$0x3] %vm61, %v711
    %728 = vst.msk [vmem:[#allocation6 + $0x8] sm:$0x3] %vm61, %v712
    %729 = vst.msk [vmem:[#allocation6 + $0xa] sm:$0x3] %vm61, %v713
    %730 = vst.msk [vmem:[#allocation6 + $0xc] sm:$0x3] %vm61, %v714
    %731 = vst.msk [vmem:[#allocation6 + $0xe] sm:$0x3] %vm61, %v715
    %732 = vst.msk [vmem:[#allocation6 + $0x10] sm:$0x3] %vm61, %v716
    %733 = vst.msk [vmem:[#allocation6 + $0x12] sm:$0x3] %vm61, %v717
    %734 = vst.msk [vmem:[#allocation6 + $0x14] sm:$0x3] %vm61, %v718
    %735 = vst.msk [vmem:[#allocation6 + $0x16] sm:$0x3] %vm61, %v719
    %736 = vst.msk [vmem:[#allocation6 + $0x18] sm:$0x3] %vm61, %v720
    %737 = vst.msk [vmem:[#allocation6 + $0x1a] sm:$0x3] %vm61, %v721
    %738 = vst.msk [vmem:[#allocation6 + $0x1c] sm:$0x3] %vm61, %v722
    %739 = vst.msk [vmem:[#allocation6 + $0x1e] sm:$0x3] %vm61, %v723
    // Predicated region
    $region34: #{tpu_custom_call.1} parent=1 // pred_check
      _
    $region35: #{tpu_custom_call.1} parent=1 // pred_check_branch
      %741 = sbr.rel (0) target = $region37
    $region36: #{tpu_custom_call.1} parent=1 // pred_region
      %s743 = ssub.s32 512, 512
      %744 = vsyncadd [#allocation4], %s743
      %s745 = sshll.u32 [#allocation5], 4
      %s746 = int_to_ptr.vmem [resolvable:$true] %s745
      %751 = dma.vmem_to_hbm [thread:$0]  %s746, 512, %s7, [#allocation4], 32, 32, 2
    $region37: #{tpu_custom_call.1} parent=1 // pred_fallthru
      _
    // Predicated region
    $region38: #{tpu_custom_call.1} parent=1 // pred_check
      _
    $region39: #{tpu_custom_call.1} parent=1 // pred_check_branch
      %753 = sbr.rel (0) target = $region41
    $region40: #{tpu_custom_call.1} parent=1 // pred_region
      %s755 = ssub.s32 512, 512
      %756 = vsyncadd [#allocation7], %s755
      %s757 = sshll.u32 [#allocation6], 4
      %s758 = int_to_ptr.vmem [resolvable:$true] %s757
      %763 = dma.vmem_to_hbm [thread:$0]  %s758, 512, %s8, [#allocation7], 32, 32, 2
    $region41: #{tpu_custom_call.1} parent=1 // pred_fallthru
      _
    // Predicated region
    $region42: #{tpu_custom_call.1} parent=1 // pred_check
      _
    $region43: #{tpu_custom_call.1} parent=1 // pred_check_branch
      %765 = sbr.rel (0) target = $region45
    $region44: #{tpu_custom_call.1} parent=1 // pred_region
      %s767 = ssub.s32 32, 32
      %768 = vsyncadd [#allocation7], %s767
      %s770 = sshll.u32 [#allocation8], 4
      %s771 = int_to_ptr.vmem [resolvable:$true] %s770
      %773 = dma.vmem_to_hbm [thread:$0]  %s771, 32, %s9, [#allocation7]
    $region45: #{tpu_custom_call.1} parent=1 // pred_fallthru
      _
    // Predicated region
    $region46: #{tpu_custom_call.1} parent=1 // pred_check
      _
    $region47: #{tpu_custom_call.1} parent=1 // pred_check_branch
      %775 = sbr.rel (0) target = $region49
    $region48: #{tpu_custom_call.1} parent=1 // pred_region
      %776 = dma.done [#allocation4], 512
    $region49: #{tpu_custom_call.1} parent=1 // pred_fallthru
      _
    // Predicated region
    $region50: #{tpu_custom_call.1} parent=1 // pred_check
      _
    $region51: #{tpu_custom_call.1} parent=1 // pred_check_branch
      %778 = sbr.rel (0) target = $region53
    $region52: #{tpu_custom_call.1} parent=1 // pred_region
      %779 = dma.done [#allocation7], 512
    $region53: #{tpu_custom_call.1} parent=1 // pred_fallthru
      _
    // Predicated region
    $region54: #{tpu_custom_call.1} parent=1 // pred_check
      _
    $region55: #{tpu_custom_call.1} parent=1 // pred_check_branch
      %781 = sbr.rel (0) target = $region57
    $region56: #{tpu_custom_call.1} parent=1 // pred_region
      %782 = dma.done [#allocation7], 32
    $region57: #{tpu_custom_call.1} parent=1 // pred_fallthru
      _
    %783 = vsyncpa [#allocation3], 1
    %784 = vsyncpa [#allocation4], 1
    %785 = vsyncpa [#allocation7], 1

</llo_original>
